<compile_context>
chip_gen: v5e
topology: v5e:2x2
jax: 0.10.0
libtpu: 0.0.40
codegen_flags: <defaults>
</compile_context>

<pallas_src>
import numpy as np
import jax
import jax.numpy as jnp
from jax.experimental import pallas as pl
from jax.experimental.pallas import tpu as pltpu


# ------------------------------ Pallas kernel --------------------------------
def _lff_kernel(w_ref, b_ref, x_ref, o_ref):
    # w_ref: (C_out, C_in)   b_ref: (C_out, 1)
    # x_ref: (1, C_in, TS)   o_ref: (1, C_out, TS)
    # Feed the MXU in the native input dtype; accumulate in f32.
    y = jnp.dot(w_ref[...], x_ref[0], preferred_element_type=jnp.float32)
    y = y + b_ref[...].astype(jnp.float32)          # (C_out, 1) lane-broadcast
    o_ref[0] = jnp.sin(y).astype(o_ref.dtype)


# ----------------------------- tile selection ---------------------------------
def _round_up(a, b):
    return (a + b - 1) // b * b


def _choose_spatial_tile(s_total, n_batches, c_in, c_out, itemsize):
    """Pick a lane-dense spatial tile that fits every generation's VMEM.

    Returns (ts, s_pad): tile size (multiple of 128) and padded spatial extent
    (multiple of ts).
    """
    LANE = 128
    TS_MAX = 8192                      # >=512 lanes already ~85% of HBM roofline
    VMEM_BUDGET = 12 * 1024 * 1024     # double-buffered in+out blocks; fits the
                                       # scoped default on v5e/v6e/v7x (v7x: 64 MiB phys)

    bytes_per_lane = 2 * (c_in + c_out) * itemsize   # 2x = double buffering
    ts = VMEM_BUDGET // max(bytes_per_lane, 1)
    ts = max(LANE, min(TS_MAX, (ts // LANE) * LANE))
    if ts >= 512:
        ts = (ts // 512) * 512         # multiple of 128 (v5e) and 256 (v6e/v7x)

    s_pad = _round_up(s_total, LANE)
    ts = min(ts, s_pad)
    s_pad = _round_up(s_total, ts)

    # v7x megacore: keep >= 2 parallel grid steps when the problem allows it.
    if n_batches * (s_pad // ts) < 2 and s_pad >= 2 * LANE:
        ts = _round_up(s_pad // 2, LANE)
        s_pad = _round_up(s_total, ts)

    return ts, s_pad


# ------------------------------- wrapper --------------------------------------
def lff_forward(x, weight, bias):
    """sin(conv1x1(x)) for NCHW input.

    x:      (N, C_in, H, W)
    weight: (C_out, C_in) or (C_out, C_in, 1, 1)
    bias:   (C_out,)
    """
    N, C_in, H, W = x.shape
    C_out = bias.shape[0]
    S = H * W

    w2 = weight.reshape(C_out, C_in)
    b2 = bias.reshape(C_out, 1)

    itemsize = jnp.dtype(x.dtype).itemsize
    ts, s_pad = _choose_spatial_tile(S, N, C_in, C_out, itemsize)
    n_tiles = s_pad // ts

    x3 = x.reshape(N, C_in, S)
    if s_pad != S:
        x3 = jnp.pad(x3, ((0, 0), (0, 0), (0, s_pad - S)))

    cost = pl.CostEstimate(
        flops=2 * N * C_out * C_in * s_pad + N * C_out * s_pad,
        transcendentals=N * C_out * s_pad,
        bytes_accessed=N * (C_in + C_out) * s_pad * itemsize
        + (w2.size + b2.size) * jnp.dtype(weight.dtype).itemsize,
    )

    out = pl.pallas_call(
        _lff_kernel,
        out_shape=jax.ShapeDtypeStruct((N, C_out, s_pad), x.dtype),
        grid=(N, n_tiles),
        in_specs=[
            pl.BlockSpec((C_out, C_in), lambda n, s: (0, 0)),   # weights (broadcast)
            pl.BlockSpec((C_out, 1), lambda n, s: (0, 0)),      # bias    (broadcast)
            pl.BlockSpec((1, C_in, ts), lambda n, s: (n, 0, s)),
        ],
        out_specs=pl.BlockSpec((1, C_out, ts), lambda n, s: (n, 0, s)),
        compiler_params=pltpu.CompilerParams(
            dimension_semantics=("parallel", "parallel")),
        cost_estimate=cost,
    )(w2, b2, x3)

    if s_pad != S:
        out = out[:, :, :S]
    return out.reshape(N, C_out, H, W)


# ------------------------------- reference ------------------------------------
def lff_ref(x, weight, bias):
    y = jnp.einsum("oi,nihw->nohw", weight.astype(jnp.float32), x.astype(jnp.float32))
    y = y + bias.astype(jnp.float32)[None, :, None, None]
    return jnp.sin(y).astype(x.dtype)


if __name__ == "__main__":
    key = jax.random.PRNGKey(0)
    k_x, k_w, k_b = jax.random.split(key, 3)

    N, C_in, H, W = 2, 4, 16, 16        # input_size = 4
    C_out = 32                          # hidden_size = 32

    x = jax.random.normal(k_x, (N, C_in, H, W), dtype=jnp.float32)
    # ConLinear(is_first=True): uniform(-sqrt(9/ch_in), sqrt(9/ch_in))
    w_bound = float(np.sqrt(9.0 / C_in))
    weight = jax.random.uniform(k_w, (C_out, C_in), jnp.float32, -w_bound, w_bound)
    # Conv2d default bias init: uniform(-1/sqrt(fan_in), 1/sqrt(fan_in))
    b_bound = float(1.0 / np.sqrt(C_in))
    bias = jax.random.uniform(k_b, (C_out,), jnp.float32, -b_bound, b_bound)

    out = jax.block_until_ready(lff_forward(x, weight, bias))
    ref = jax.block_until_ready(lff_ref(x, weight, bias))

    assert out.shape == (N, C_out, H, W), out.shape
    assert np.allclose(np.asarray(out), np.asarray(ref), atol=1e-5, rtol=1e-5), (
        float(np.max(np.abs(np.asarray(out) - np.asarray(ref))))
    )
    print("KERNEL_OK")
</pallas_src>

<mosaic_0001>
module attributes {stable_mosaic.version = 11 : i64} {
  func.func @_lff_kernel(%arg0: i32, %arg1: i32, %arg2: memref<32x4xf32, #tpu.memory_space<vmem>>, %arg3: memref<32x1xf32, #tpu.memory_space<vmem>>, %arg4: memref<1x4x256xf32, #tpu.memory_space<vmem>>, %arg5: memref<1x32x256xf32, #tpu.memory_space<vmem>>) attributes {dimension_semantics = [#tpu.dimension_semantics<parallel>, #tpu.dimension_semantics<parallel>], iteration_bounds = array<i64: 2, 1>, scalar_prefetch = 0 : i64, scratch_operands = 0 : i64, tpu.core_type = #tpu.core_type<tc>, window_params = [{pipeline_mode = #tpu.pipeline_mode<synchronous>, transform_indices = @transform_0, window_bounds = array<i64: 32, 4>}, {pipeline_mode = #tpu.pipeline_mode<synchronous>, transform_indices = @transform_1, window_bounds = array<i64: 32, 1>}, {transform_indices = @transform_2, window_bounds = array<i64: 1, 4, 256>}, {transform_indices = @transform_3, window_bounds = array<i64: 1, 32, 256>}]} {
    %c0 = arith.constant 0 : index
    %c0_0 = arith.constant 0 : index
    %0 = vector.load %arg2[%c0, %c0_0] : memref<32x4xf32, #tpu.memory_space<vmem>>, vector<32x4xf32>
    %c0_1 = arith.constant 0 : index
    %c0_2 = arith.constant 0 : index
    %c0_3 = arith.constant 0 : index
    %1 = vector.load %arg4[%c0_1, %c0_2, %c0_3] : memref<1x4x256xf32, #tpu.memory_space<vmem>>, vector<1x4x256xf32>
    %2 = vector.shape_cast %1 : vector<1x4x256xf32> to vector<4x256xf32>
    %cst = arith.constant dense<0.000000e+00> : vector<32x256xf32>
    %3 = tpu.matmul %0, %2, %cst {dimension_numbers = #tpu.dot_dimension_numbers<[1], [0], [0], [1], [0, 0, 1, 1], [], []>} : vector<32x4xf32>, vector<4x256xf32>, vector<32x256xf32> -> vector<32x256xf32>
    %c0_4 = arith.constant 0 : index
    %c0_5 = arith.constant 0 : index
    %4 = vector.load %arg3[%c0_4, %c0_5] : memref<32x1xf32, #tpu.memory_space<vmem>>, vector<32x1xf32>
    %5 = vector.broadcast %4 : vector<32x1xf32> to vector<32x256xf32>
    %6 = arith.addf %3, %5 : vector<32x256xf32>
    %7 = math.sin %6 : vector<32x256xf32>
    %c0_6 = arith.constant 0 : index
    %c0_7 = arith.constant 0 : index
    %c0_8 = arith.constant 0 : index
    %8 = vector.load %arg5[%c0_6, %c0_7, %c0_8] : memref<1x32x256xf32, #tpu.memory_space<vmem>>, vector<1x32x256xf32>
    %9 = vector.shape_cast %8 : vector<1x32x256xf32> to vector<32x256xf32>
    %10 = vector.shape_cast %7 : vector<32x256xf32> to vector<1x32x256xf32>
    tpu.vector_store %arg5[%c0_6, %c0_7, %c0_8], %10 {strides = array<i32>} : memref<1x32x256xf32, #tpu.memory_space<vmem>>, vector<1x32x256xf32>,
    return
  }
  func.func @transform_0(%arg0: i32, %arg1: i32) -> (i32, i32) {
    %c0_i32 = arith.constant 0 : i32
    %c0_i32_0 = arith.constant 0 : i32
    %c0_i32_1 = arith.constant 0 : i32
    return %c0_i32, %c0_i32_0 : i32, i32
  }
  func.func @transform_1(%arg0: i32, %arg1: i32) -> (i32, i32) {
    %c0_i32 = arith.constant 0 : i32
    %c0_i32_0 = arith.constant 0 : i32
    %c0_i32_1 = arith.constant 0 : i32
    return %c0_i32, %c0_i32_0 : i32, i32
  }
  func.func @transform_2(%arg0: i32, %arg1: i32) -> (i32, i32, i32) {
    %c0_i32 = arith.constant 0 : i32
    %c0_i32_0 = arith.constant 0 : i32
    return %arg0, %c0_i32, %arg1 : i32, i32, i32
  }
  func.func @transform_3(%arg0: i32, %arg1: i32) -> (i32, i32, i32) {
    %c0_i32 = arith.constant 0 : i32
    %c0_i32_0 = arith.constant 0 : i32
    return %arg0, %c0_i32, %arg1 : i32, i32, i32
  }
}

</mosaic_0001>

<llo_original>
// kernel: tpu_custom_call.1
$region0: #{tpu_custom_call.1}
  #allocation0 [shape = 'u32[]', space=smem, size = 0x4, offset = 0x4, fixed_abs, tag = 'smem constant byte address 0x4 - core index']
  #allocation1 [shape = 'u32[72,128]{1,0:T(1,128)}', space=vmem, size = 0x9000, scoped, tag = 'internal scratch']
  %s0 = inlined_call_operand.vmem [shape: f32[32,4], index: 0, kind: input, shape index: {}]
  %s1 = inlined_call_operand.vmem [shape: f32[32,1], index: 1, kind: input, shape index: {}]
  %s2 = inlined_call_operand.vmem [shape: f32[2,4,256], index: 2, kind: input, shape index: {}]
  %s3 = inlined_call_operand.hbm [shape: f32[2,32,256], index: 3, kind: output, shape index: {}]
  %s4 = sld [smem:[#allocation0]]
  $region45: #{tpu_custom_call.1} parent=0
    _
  %s6 = ssub.s32 1, %s4
  %s7 = scalar_select 0, %s6, %s4
  $region1: #{tpu_custom_call.1} parent=0
    #allocation2 [shape = 'u8[65536]{0}', space=vmem, size = 0x10000, scoped, tag = 'output window, operand 0']
    #allocation3 [shape = 's32[2]{0}', space=sflag, size = 0x8, scoped, tag = 'scoped memory for tpu_custom_call.1']
    %8 = vsyncpa [#allocation3], 0
    %s9 = scalar_lea.sflag [#allocation3], 1
    %10 = vsyncpa %s9, 0
    loop: start=0, step=1, limit=4
    $region2: #{tpu_custom_call.1} parent=1 // loop_pre_header
      _
    $region3: #{tpu_custom_call.1} parent=1 // loop_header
      %s12 = sphi 0, %s16
      %p13 = scmp.ge.s32.totalorder %s12, 4
      %s19 = sphi 0, %s31
      %s20 = sphi 0, %s27
      %s21 = sphi 0, %s19
      %s22 = sphi 0, %s20
      %s23 = sphi 0, %s21
      %s24 = sphi 0, %s22
      %s32 = sphi 0, %s32
      %s34 = sphi 0, %s32
      %s35 = sphi 0, %s34
      %s49 = sphi 0, %s35
      %s53 = sphi 0, %s53
      %s55 = sphi 0, %s53
      %s56 = sphi 0, %s55
      %s70 = sphi 0, %s56
      %s78 = sphi 0, %s80
      %s81 = sphi 0, %s78
      %s82 = sphi 0, %s81
      %s98 = sphi 0, %s82
      %s106 = sphi 0, %s108
      %s109 = sphi 0, %s106
      %s110 = sphi 0, %s109
      %s126 = sphi 0, %s110
    $region4: #{tpu_custom_call.1} parent=1 // loop_header_branch
      %15 = sbr.rel (%p13) target = $region8
    $region5: #{tpu_custom_call.1} parent=1 // loop_body
      %s17 = ssub.s32 %s12, 1
      %s18 = ssub.s32 %s12, 2
      %s25 = sadd.s32 1, %s20
      %p26 = scmp.ge.s32.totalorder %s25, 1
      %s27 = scalar_select %p26, 0, %s25
      %s28 = sadd.s32 1, %s19
      %s29 = scalar_select %p26, %s28, %s19
      %p30 = scmp.ge.s32.totalorder %s29, 2
      %s31 = scalar_select %p30, 0, %s29
      %s33 = sadd.s32 %s32, 1
      %p36 = scmp.eq.s32.totalorder %s12, 1
      %p37 = scmp.ne.s32.totalorder %s32, %s34
      %p38 = scmp.eq.s32.totalorder %s12, 0
      %p39 = por %p37, %p38
      %p40 = scmp.ne.s32.totalorder %s32, %s34
      %p41 = scmp.eq.s32.totalorder %s17, 1
      %p42 = por %p40, %p41
      %p43 = scmp.ne.s32.totalorder %s34, %s35
      %p44 = scmp.eq.s32.totalorder %s17, 0
      %p45 = por %p43, %p44
      %p46 = scmp.ne.s32.totalorder %s34, %s35
      %p47 = scmp.eq.s32.totalorder %s18, 1
      %p48 = por %p46, %p47
      %p50 = scmp.ne.s32.totalorder %s35, %s49
      %p51 = scmp.eq.s32.totalorder %s18, 0
      %p52 = por %p50, %p51
      %s54 = sadd.s32 %s53, 1
      %p57 = scmp.eq.s32.totalorder %s12, 1
      %p58 = scmp.ne.s32.totalorder %s53, %s55
      %p59 = scmp.eq.s32.totalorder %s12, 0
      %p60 = por %p58, %p59
      %p61 = scmp.ne.s32.totalorder %s53, %s55
      %p62 = scmp.eq.s32.totalorder %s17, 1
      %p63 = por %p61, %p62
      %p64 = scmp.ne.s32.totalorder %s55, %s56
      %p65 = scmp.eq.s32.totalorder %s17, 0
      %p66 = por %p64, %p65
      %p67 = scmp.ne.s32.totalorder %s55, %s56
      %p68 = scmp.eq.s32.totalorder %s18, 1
      %p69 = por %p67, %p68
      %p71 = scmp.ne.s32.totalorder %s56, %s70
      %p72 = scmp.eq.s32.totalorder %s18, 0
      %p73 = por %p71, %p72
      %s74 = ssub.s32 %s19, %s31
      %s75 = ssub.s32 %s20, %s27
      %s76 = sor.u32 %s74, %s75
      %p77 = scmp.eq.s32.totalorder %s76, 0
      %s79 = sadd.s32 %s78, 1
      %s80 = scalar_select %p77, %s78, %s79
      %p83 = pneg %p77
      %p84 = scmp.eq.s32.totalorder %s12, 1
      %p85 = por %p83, %p84
      %p86 = scmp.ne.s32.totalorder %s78, %s81
      %p87 = scmp.eq.s32.totalorder %s12, 0
      %p88 = por %p86, %p87
      %p89 = scmp.ne.s32.totalorder %s78, %s81
      %p90 = scmp.eq.s32.totalorder %s17, 1
      %p91 = por %p89, %p90
      %p92 = scmp.ne.s32.totalorder %s81, %s82
      %p93 = scmp.eq.s32.totalorder %s17, 0
      %p94 = por %p92, %p93
      %p95 = scmp.ne.s32.totalorder %s81, %s82
      %p96 = scmp.eq.s32.totalorder %s18, 1
      %p97 = por %p95, %p96
      %p99 = scmp.ne.s32.totalorder %s82, %s98
      %p100 = scmp.eq.s32.totalorder %s18, 0
      %p101 = por %p99, %p100
      %s102 = ssub.s32 %s19, %s31
      %s103 = ssub.s32 %s20, %s27
      %s104 = sor.u32 %s102, %s103
      %p105 = scmp.eq.s32.totalorder %s104, 0
      %s107 = sadd.s32 %s106, 1
      %s108 = scalar_select %p105, %s106, %s107
      %p111 = pneg %p105
      %p112 = scmp.eq.s32.totalorder %s12, 1
      %p113 = por %p111, %p112
      %p114 = scmp.ne.s32.totalorder %s106, %s109
      %p115 = scmp.eq.s32.totalorder %s12, 0
      %p116 = por %p114, %p115
      %p117 = scmp.ne.s32.totalorder %s106, %s109
      %p118 = scmp.eq.s32.totalorder %s17, 1
      %p119 = por %p117, %p118
      %p120 = scmp.ne.s32.totalorder %s109, %s110
      %p121 = scmp.eq.s32.totalorder %s17, 0
      %p122 = por %p120, %p121
      %p123 = scmp.ne.s32.totalorder %s109, %s110
      %p124 = scmp.eq.s32.totalorder %s18, 1
      %p125 = por %p123, %p124
      %p127 = scmp.ne.s32.totalorder %s110, %s126
      %p128 = scmp.eq.s32.totalorder %s18, 0
      %p129 = por %p127, %p128
      %p130 = scmp.le.s32.totalorder 1, %s12
      %p131 = scmp.lt.s32.totalorder %s12, 3
      %p132 = pnand %p130, %p131
      %p133 = pneg %p132
      // Predicated region
      $region9: #{tpu_custom_call.1} parent=5 // pred_check
        _
      $region10: #{tpu_custom_call.1} parent=5 // pred_check_branch
        %135 = sbr.rel (%p132) target = $region12
      $region11: #{tpu_custom_call.1} parent=5 // pred_region
        %s136 = ssub.s32 %s12, 1
        // Predicated region
        $region13: #{tpu_custom_call.1} parent=11 // pred_check
          %p137 = pneg %p45
        $region14: #{tpu_custom_call.1} parent=11 // pred_check_branch
          %139 = sbr.rel (%p137) target = $region16
        $region15: #{tpu_custom_call.1} parent=11 // pred_region
          _
        $region16: #{tpu_custom_call.1} parent=11 // pred_fallthru
          _
        // Predicated region
        $region17: #{tpu_custom_call.1} parent=11 // pred_check
          %p140 = pneg %p66
        $region18: #{tpu_custom_call.1} parent=11 // pred_check_branch
          %142 = sbr.rel (%p140) target = $region20
        $region19: #{tpu_custom_call.1} parent=11 // pred_region
          _
        $region20: #{tpu_custom_call.1} parent=11 // pred_fallthru
          _
      $region12: #{tpu_custom_call.1} parent=5 // pred_fallthru
        _
      %p143 = scmp.lt.s32.totalorder %s12, 2
      // Predicated region
      $region21: #{tpu_custom_call.1} parent=5 // pred_check
        %p144 = pneg %p143
      $region22: #{tpu_custom_call.1} parent=5 // pred_check_branch
        %146 = sbr.rel (%p144) target = $region24
      $region23: #{tpu_custom_call.1} parent=5 // pred_region
        // Predicated region
        $region25: #{tpu_custom_call.1} parent=23 // pred_check
          %p147 = pneg %p88
        $region26: #{tpu_custom_call.1} parent=23 // pred_check_branch
          %149 = sbr.rel (%p147) target = $region28
        $region27: #{tpu_custom_call.1} parent=23 // pred_region
          %s150 = smul.u32 2, %s20
          %p151 = scmp.lt.s32.totalorder %s19, 1
          %s152 = scalar_select %p151, %s19, 1
          %p153 = scmp.lt.s32.totalorder %s150, 1
          %s154 = scalar_select %p153, %s150, 1
          %s155 = smul.addr %s152, 2
          %s156 = sadd.s32 %s154, %s155
          %s157 = smul.addr %s156, 4
          %s158 = scalar_lea.vmem %s2, %s157
          %s159 = smul.u32 2, %s20
        $region28: #{tpu_custom_call.1} parent=23 // pred_fallthru
          _
      $region24: #{tpu_custom_call.1} parent=5 // pred_fallthru
        _
      %p160 = scmp.le.s32.totalorder 1, %s12
      %p161 = scmp.lt.s32.totalorder %s12, 3
      %p162 = pnand %p160, %p161
      %p163 = pneg %p162
      // Predicated region
      $region29: #{tpu_custom_call.1} parent=5 // pred_check
        _
      $region30: #{tpu_custom_call.1} parent=5 // pred_check_branch
        %165 = sbr.rel (%p162) target = $region32
      $region31: #{tpu_custom_call.1} parent=5 // pred_region
        %s166 = ssub.s32 %s12, 1
        %p167 = pneg %p45
        %p168 = pneg %p42
        %p169 = pneg %p66
        %p170 = pneg %p63
        %s171 = smul.u32 2, %s22
        %p172 = scmp.lt.s32.totalorder %s21, 1
        %s173 = scalar_select %p172, %s21, 1
        %p174 = scmp.lt.s32.totalorder %s171, 1
        %s175 = scalar_select %p174, %s171, 1
        %s176 = smul.addr %s173, 2
        %s177 = sadd.s32 %s175, %s176
        %s178 = smul.addr %s177, 4
        %s179 = scalar_lea.vmem %s2, %s178
        %p180 = pneg %p94
        %p181 = pneg %p91
        %p182 = pneg %p122
        %p183 = pneg %p119
        %s184 = sand.u32 %s109, 1
        %s185 = scalar_lea.sflag [#allocation3], %s184
        %s186 = sand.u32 %s109, 1
        %s187 = smul.addr %s186, 64
        %s188 = scalar_lea.vmem [#allocation2], %s187
        %s189 = smul.u32 2, %s22
        %p190 = scmp.lt.s32.totalorder %s21, 1
        %s191 = scalar_select %p190, %s21, 1
        %p192 = scmp.lt.s32.totalorder %s189, 1
        %s193 = scalar_select %p192, %s189, 1
        %s194 = smul.addr %s191, 2
        %s195 = sadd.s32 %s193, %s194
        %s196 = smul.addr %s195, 4
        %s197 = scalar_lea.vmem %s2, %s196
        %s198 = smul.u32 2, %s22
        %s199 = smul.u32 2, %s22
        %v200 = vld [vmem:[%s0] sm:$0xff]
        %v201 = vld [vmem:[%s0 + $0x8] sm:$0xff]
        %v202 = vld [vmem:[%s0 + $0x10] sm:$0xff]
        %v203 = vld [vmem:[%s0 + $0x18] sm:$0xff]
        %v204 = vld [vmem:[%s197] sm:$0xff]
        %v205 = vld [vmem:[%s1] sm:$0xff]
        %v206 = vld [vmem:[%s1 + $0x8] sm:$0xff]
        %v207 = vld [vmem:[%s1 + $0x10] sm:$0xff]
        %v208 = vld [vmem:[%s1 + $0x18] sm:$0xff]
        %210 = vset.pattern.permute.xlu0 0
        %211 = vperm.xlu0 %210, %v205
        %v212 = vpop.permute.xlu0 %211
        %215 = vset.pattern.permute.xlu0 0
        %216 = vperm.xlu0 %215, %v206
        %v217 = vpop.permute.xlu0 %216
        %220 = vset.pattern.permute.xlu0 0
        %221 = vperm.xlu0 %220, %v207
        %v222 = vpop.permute.xlu0 %221
        %225 = vset.pattern.permute.xlu0 0
        %226 = vperm.xlu0 %225, %v208
        %v227 = vpop.permute.xlu0 %226
        %230 = vst [vmem:[#allocation1] ss:$2 sm:$0xff] %v204
        %v231 = vld.sshfl [vmem:[#allocation1] sm:$0xff pattern:$0x75316420]
        %v232 = vld.sshfl [vmem:[#allocation1 + $0x8] sm:$0xff pattern:$0x75316420]
        %vm233 = vcmask 31744
        %v235 = vsel %vm233, %v200, 0
        %v238 = vsel %vm233, %v201, 0
        %v241 = vsel %vm233, %v202, 0
        %v244 = vsel %vm233, %v203, 0
        %vm246 = vcmask 1043456
        %v247 = vsel %vm246, %v231, 0
        %v249 = vsel %vm246, %v232, 0
        %251 = vmatpush.msra.mxu0 0.0
        %252 = vmatpush.msra.mxu0 0.0
        %253 = vmatpush.msra.mxu0 0.0
        %254 = vmatpush.msra.mxu0 0.0
        %255 = vmatpush.msra.mxu0 0.0
        %256 = vmatpush.msra.mxu0 0.0
        %257 = vmatpush.msra.mxu0 0.0
        %258 = vmatpush.msra.mxu0 0.0
        %259 = vmatpush.msra.mxu0 0.0
        %260 = vmatpush.msra.mxu0 0.0
        %261 = vmatpush.msra.mxu0 0.0
        %262 = vmatpush.msra.mxu0 0.0
        %263 = vmatpush.msra.mxu0 0.0
        %264 = vmatpush.msra.mxu0 0.0
        %265 = vmatpush.msra.mxu0 0.0
        %266 = vmatpush.msra.mxu0 %v247
        %267 = vmatmul.f32.gmra.mxu0 %v235
        %v268 = vpop.f32.mrf.mxu0
        %v269 = vadd.f32 %v212, %v268
        %270 = vmatmul.f32.gmra.mxu0 %v238
        %v271 = vpop.f32.mrf.mxu0
        %v272 = vadd.f32 %v217, %v271
        %273 = vmatmul.f32.gmra.mxu0 %v241
        %v274 = vpop.f32.mrf.mxu0
        %v275 = vadd.f32 %v222, %v274
        %276 = vmatmul.f32.gmra.mxu0 %v244
        %v277 = vpop.f32.mrf.mxu0
        %v278 = vadd.f32 %v227, %v277
        %279 = vdwg.mxu0
        %280 = vmatpush.msra.mxu0 0.0
        %281 = vmatpush.msra.mxu0 0.0
        %282 = vmatpush.msra.mxu0 0.0
        %283 = vmatpush.msra.mxu0 0.0
        %284 = vmatpush.msra.mxu0 0.0
        %285 = vmatpush.msra.mxu0 0.0
        %286 = vmatpush.msra.mxu0 0.0
        %287 = vmatpush.msra.mxu0 0.0
        %288 = vmatpush.msra.mxu0 0.0
        %289 = vmatpush.msra.mxu0 0.0
        %290 = vmatpush.msra.mxu0 0.0
        %291 = vmatpush.msra.mxu0 0.0
        %292 = vmatpush.msra.mxu0 0.0
        %293 = vmatpush.msra.mxu0 0.0
        %294 = vmatpush.msra.mxu0 0.0
        %295 = vmatpush.msra.mxu0 %v249
        %296 = vmatmul.f32.gmra.mxu0 %v235
        %v297 = vpop.f32.mrf.mxu0
        %v298 = vadd.f32 %v212, %v297
        %299 = vmatmul.f32.gmra.mxu0 %v238
        %v300 = vpop.f32.mrf.mxu0
        %v301 = vadd.f32 %v217, %v300
        %302 = vmatmul.f32.gmra.mxu0 %v241
        %v303 = vpop.f32.mrf.mxu0
        %v304 = vadd.f32 %v222, %v303
        %305 = vmatmul.f32.gmra.mxu0 %v244
        %v306 = vpop.f32.mrf.mxu0
        %v307 = vadd.f32 %v227, %v306
        %308 = vdwg.mxu0
        %v309 = vand.u32 2147483647, %v269
        %vm310 = vcmp.le.f32.partialorder %v309, 0.7853982
        %vm311 = vcmp.lt.s32.totalorder %v269, 0
        %v312 = vand.u32 %v269, 2139095040
        %v313 = vshrl.u32 %v312, 23
        %v314 = vsub.s32 %v313, 127
        %v315 = vand.u32 2147483647, %v269
        %v316 = vand.u32 %v315, 8388607
        %v317 = vor.u32 %v316, 8388608
        %v318 = vsub.s32 0, %v317
        %v319 = vadd.s32 %v314, 1
        %vm320 = vcmp.gt.s32.totalorder %v319, 0
        %v321 = vsel %vm320, %v319, 0
        %v322 = vshrl.u32 %v321, 5
        %v323 = vand.u32 %v321, 31
        %v324 = vsub.s32 32, %v323
        %v325 = vshrl.u32 683565275, %v324
        %v326 = vshll.u32 683565275, %v323
        %v327 = vshrl.u32 2475754826, %v324
        %v328 = vor.u32 %v326, %v327
        %v329 = vshll.u32 2475754826, %v323
        %v330 = vshrl.u32 2131351028, %v324
        %v331 = vor.u32 %v329, %v330
        %v332 = vshll.u32 2131351028, %v323
        %v333 = vshrl.u32 2102212464, %v324
        %v334 = vor.u32 %v332, %v333
        %v335 = vshll.u32 2102212464, %v323
        %v336 = vshrl.u32 920167782, %v324
        %v337 = vor.u32 %v335, %v336
        %v338 = vshll.u32 920167782, %v323
        %v339 = vshrl.u32 1326507024, %v324
        %v340 = vor.u32 %v338, %v339
        %vm341 = vcmp.lt.s32.totalorder %v322, 1
        %vm342 = vcmp.lt.s32.totalorder %v322, 2
        %vm343 = vcmp.lt.s32.totalorder %v322, 3
        %vm344 = vcmp.lt.s32.totalorder %v322, 4
        %v345 = vsel %vm341, %v325, %v328
        %v346 = vsel %vm344, %v334, 2102212464
        %v347 = vsel %vm343, %v331, %v346
        %v348 = vsel %vm342, %v345, %v347
        %v349 = vsel %vm341, %v328, %v331
        %v350 = vsel %vm344, %v337, 920167782
        %v351 = vsel %vm343, %v334, %v350
        %v352 = vsel %vm342, %v349, %v351
        %v353 = vsel %vm341, %v331, %v334
        %v354 = vsel %vm344, %v340, 1326507024
        %v355 = vsel %vm343, %v337, %v354
        %v356 = vsel %vm342, %v353, %v355
        %v357 = vshll.u32 %v317, 8
        %v358 = vand.u32 %v357, 65535
        %v359 = vshrl.u32 %v357, 16
        %v360 = vand.u32 %v356, 65535
        %v361 = vshrl.u32 %v356, 16
        %v362 = vmul.u32 %v358, %v360
        %v363 = vmul.u32 %v358, %v361
        %v364 = vmul.u32 %v359, %v360
        %v365 = vmul.u32 %v359, %v361
        %v366 = vshll.u32 %v363, 16
        %v367 = vshrl.u32 %v363, 16
        %v368 = vshll.u32 %v364, 16
        %v369 = vshrl.u32 %v364, 16
        %vm370 = vc.u32 %v362, %v366
        %v371 = vsel %vm370, 1, 0
        %v372 = vadd.s32 %v362, %v366
        %v373 = vadd.s32 %v365, %v371
        %vm374 = vc.u32 %v372, %v368
        %v375 = vsel %vm374, 1, 0
        %v376 = vadd.s32 %v372, %v368
        %v377 = vadd.s32 %v373, %v375
        %v378 = vadd.s32 %v377, %v367
        %v379 = vadd.s32 %v378, %v369
        %v380 = vand.u32 %v357, 65535
        %v381 = vshrl.u32 %v357, 16
        %v382 = vand.u32 %v352, 65535
        %v383 = vshrl.u32 %v352, 16
        %v384 = vmul.u32 %v380, %v382
        %v385 = vmul.u32 %v380, %v383
        %v386 = vmul.u32 %v381, %v382
        %v387 = vmul.u32 %v381, %v383
        %v388 = vshll.u32 %v385, 16
        %v389 = vshrl.u32 %v385, 16
        %v390 = vshll.u32 %v386, 16
        %v391 = vshrl.u32 %v386, 16
        %vm392 = vc.u32 %v384, %v388
        %v393 = vsel %vm392, 1, 0
        %v394 = vadd.s32 %v384, %v388
        %v395 = vadd.s32 %v387, %v393
        %vm396 = vc.u32 %v394, %v390
        %v397 = vsel %vm396, 1, 0
        %v398 = vadd.s32 %v394, %v390
        %v399 = vadd.s32 %v395, %v397
        %v400 = vadd.s32 %v399, %v389
        %v401 = vadd.s32 %v400, %v391
        %v402 = vmul.u32 %v357, %v348
        %v403 = vadd.s32 %v379, %v398
        %vm404 = vc.u32 %v379, %v398
        %v405 = vadd.s32 %v401, 1
        %v406 = vsel %vm404, %v405, %v401
        %v407 = vadd.s32 %v402, %v406
        %v408 = vadd.s32 %v407, 536870912
        %v409 = vshrl.u32 %v408, 30
        %v410 = vshll.u32 %v409, 30
        %v411 = vsub.s32 %v407, %v410
        %vm412 = vcmp.lt.s32.totalorder %v411, 0
        %v413 = vsub.s32 0, %v411
        %v414 = vsel %vm412, %v413, %v411
        %v415 = vclz %v414
        %v416 = vsub.s32 %v415, 2
        %vm417 = vcmp.gt.s32.totalorder 0, %v416
        %v418 = vsel %vm417, 0, %v416
        %v419 = vsub.s32 32, %v418
        %v420 = vshll.u32 %v411, %v418
        %v421 = vshrl.u32 %v403, %v419
        %v422 = vor.u32 %v420, %v421
        %v423 = vsub.s32 4294967266, %v418
        %v424 = vadd.s32 %v423, 127
        %v425 = vshll.u32 %v424, 23
        %v426 = vor.u32 4788187, %v425
        %v427 = vand.u32 2147483647, %v426
        %v429 = vcvt.s32.f32 %v422
        %v430 = vmul.f32 %v429, %v427
        %v431 = vxor.u32 %v430, 2147483648
        %v432 = vsel %vm311, %v431, %v430
        %v433 = vsub.s32 4, %v409
        %v434 = vsel %vm311, %v433, %v409
        %v435 = vsel %vm310, %v269, %v432
        %v436 = vsel %vm310, 0, %v434
        %v437 = vmul.f32 %v435, %v435
        %v438 = vmul.f32 %v437, -0.001358992
        %v439 = vadd.f32 %v438, 0.041655596
        %v440 = vmul.f32 %v437, %v439
        %v441 = vadd.f32 %v440, -0.4999988
        %v442 = vmul.f32 %v437, %v441
        %v443 = vadd.f32 1.0, %v442
        %v444 = vmul.f32 %v435, %v435
        %v445 = vmul.f32 %v444, -0.00019511016
        %v446 = vadd.f32 %v445, 0.008332121
        %v447 = vmul.f32 %v444, %v446
        %v448 = vadd.f32 %v447, -0.16666654
        %v449 = vmul.f32 %v444, %v448
        %v450 = vadd.f32 %v449, 1.0
        %v451 = vmul.f32 %v450, %v435
        %vm452 = vweird.f32 %v269
        %v453 = vadd.s32 %v436, 3
        %v454 = vand.u32 %v453, 3
        %vm455 = vcmp.lt.s32.totalorder %v454, 2
        %vm456 = vcmp.eq.s32.totalorder %v454, 0
        %v457 = vxor.u32 %v451, 2147483648
        %v458 = vsel %vm456, %v443, %v457
        %vm459 = vcmp.eq.s32.totalorder %v454, 2
        %v460 = vxor.u32 %v443, 2147483648
        %v461 = vsel %vm459, %v460, %v451
        %v462 = vsel %vm455, %v458, %v461
        %v463 = vsel %vm452, nan, %v462
        %v464 = vand.u32 2147483647, %v298
        %vm465 = vcmp.le.f32.partialorder %v464, 0.7853982
        %vm466 = vcmp.lt.s32.totalorder %v298, 0
        %v467 = vand.u32 %v298, 2139095040
        %v468 = vshrl.u32 %v467, 23
        %v469 = vsub.s32 %v468, 127
        %v470 = vand.u32 2147483647, %v298
        %v471 = vand.u32 %v470, 8388607
        %v472 = vor.u32 %v471, 8388608
        %v473 = vsub.s32 0, %v472
        %v474 = vadd.s32 %v469, 1
        %vm475 = vcmp.gt.s32.totalorder %v474, 0
        %v476 = vsel %vm475, %v474, 0
        %v477 = vshrl.u32 %v476, 5
        %v478 = vand.u32 %v476, 31
        %v479 = vsub.s32 32, %v478
        %v480 = vshrl.u32 683565275, %v479
        %v481 = vshll.u32 683565275, %v478
        %v482 = vshrl.u32 2475754826, %v479
        %v483 = vor.u32 %v481, %v482
        %v484 = vshll.u32 2475754826, %v478
        %v485 = vshrl.u32 2131351028, %v479
        %v486 = vor.u32 %v484, %v485
        %v487 = vshll.u32 2131351028, %v478
        %v488 = vshrl.u32 2102212464, %v479
        %v489 = vor.u32 %v487, %v488
        %v490 = vshll.u32 2102212464, %v478
        %v491 = vshrl.u32 920167782, %v479
        %v492 = vor.u32 %v490, %v491
        %v493 = vshll.u32 920167782, %v478
        %v494 = vshrl.u32 1326507024, %v479
        %v495 = vor.u32 %v493, %v494
        %vm496 = vcmp.lt.s32.totalorder %v477, 1
        %vm497 = vcmp.lt.s32.totalorder %v477, 2
        %vm498 = vcmp.lt.s32.totalorder %v477, 3
        %vm499 = vcmp.lt.s32.totalorder %v477, 4
        %v500 = vsel %vm496, %v480, %v483
        %v501 = vsel %vm499, %v489, 2102212464
        %v502 = vsel %vm498, %v486, %v501
        %v503 = vsel %vm497, %v500, %v502
        %v504 = vsel %vm496, %v483, %v486
        %v505 = vsel %vm499, %v492, 920167782
        %v506 = vsel %vm498, %v489, %v505
        %v507 = vsel %vm497, %v504, %v506
        %v508 = vsel %vm496, %v486, %v489
        %v509 = vsel %vm499, %v495, 1326507024
        %v510 = vsel %vm498, %v492, %v509
        %v511 = vsel %vm497, %v508, %v510
        %v512 = vshll.u32 %v472, 8
        %v513 = vand.u32 %v512, 65535
        %v514 = vshrl.u32 %v512, 16
        %v515 = vand.u32 %v511, 65535
        %v516 = vshrl.u32 %v511, 16
        %v517 = vmul.u32 %v513, %v515
        %v518 = vmul.u32 %v513, %v516
        %v519 = vmul.u32 %v514, %v515
        %v520 = vmul.u32 %v514, %v516
        %v521 = vshll.u32 %v518, 16
        %v522 = vshrl.u32 %v518, 16
        %v523 = vshll.u32 %v519, 16
        %v524 = vshrl.u32 %v519, 16
        %vm525 = vc.u32 %v517, %v521
        %v526 = vsel %vm525, 1, 0
        %v527 = vadd.s32 %v517, %v521
        %v528 = vadd.s32 %v520, %v526
        %vm529 = vc.u32 %v527, %v523
        %v530 = vsel %vm529, 1, 0
        %v531 = vadd.s32 %v527, %v523
        %v532 = vadd.s32 %v528, %v530
        %v533 = vadd.s32 %v532, %v522
        %v534 = vadd.s32 %v533, %v524
        %v535 = vand.u32 %v512, 65535
        %v536 = vshrl.u32 %v512, 16
        %v537 = vand.u32 %v507, 65535
        %v538 = vshrl.u32 %v507, 16
        %v539 = vmul.u32 %v535, %v537
        %v540 = vmul.u32 %v535, %v538
        %v541 = vmul.u32 %v536, %v537
        %v542 = vmul.u32 %v536, %v538
        %v543 = vshll.u32 %v540, 16
        %v544 = vshrl.u32 %v540, 16
        %v545 = vshll.u32 %v541, 16
        %v546 = vshrl.u32 %v541, 16
        %vm547 = vc.u32 %v539, %v543
        %v548 = vsel %vm547, 1, 0
        %v549 = vadd.s32 %v539, %v543
        %v550 = vadd.s32 %v542, %v548
        %vm551 = vc.u32 %v549, %v545
        %v552 = vsel %vm551, 1, 0
        %v553 = vadd.s32 %v549, %v545
        %v554 = vadd.s32 %v550, %v552
        %v555 = vadd.s32 %v554, %v544
        %v556 = vadd.s32 %v555, %v546
        %v557 = vmul.u32 %v512, %v503
        %v558 = vadd.s32 %v534, %v553
        %vm559 = vc.u32 %v534, %v553
        %v560 = vadd.s32 %v556, 1
        %v561 = vsel %vm559, %v560, %v556
        %v562 = vadd.s32 %v557, %v561
        %v563 = vadd.s32 %v562, 536870912
        %v564 = vshrl.u32 %v563, 30
        %v565 = vshll.u32 %v564, 30
        %v566 = vsub.s32 %v562, %v565
        %vm567 = vcmp.lt.s32.totalorder %v566, 0
        %v568 = vsub.s32 0, %v566
        %v569 = vsel %vm567, %v568, %v566
        %v570 = vclz %v569
        %v571 = vsub.s32 %v570, 2
        %vm572 = vcmp.gt.s32.totalorder 0, %v571
        %v573 = vsel %vm572, 0, %v571
        %v574 = vsub.s32 32, %v573
        %v575 = vshll.u32 %v566, %v573
        %v576 = vshrl.u32 %v558, %v574
        %v577 = vor.u32 %v575, %v576
        %v578 = vsub.s32 4294967266, %v573
        %v579 = vadd.s32 %v578, 127
        %v580 = vshll.u32 %v579, 23
        %v581 = vor.u32 4788187, %v580
        %v582 = vand.u32 2147483647, %v581
        %v584 = vcvt.s32.f32 %v577
        %v585 = vmul.f32 %v584, %v582
        %v586 = vxor.u32 %v585, 2147483648
        %v587 = vsel %vm466, %v586, %v585
        %v588 = vsub.s32 4, %v564
        %v589 = vsel %vm466, %v588, %v564
        %v590 = vsel %vm465, %v298, %v587
        %v591 = vsel %vm465, 0, %v589
        %v592 = vmul.f32 %v590, %v590
        %v593 = vmul.f32 %v592, -0.001358992
        %v594 = vadd.f32 %v593, 0.041655596
        %v595 = vmul.f32 %v592, %v594
        %v596 = vadd.f32 %v595, -0.4999988
        %v597 = vmul.f32 %v592, %v596
        %v598 = vadd.f32 1.0, %v597
        %v599 = vmul.f32 %v590, %v590
        %v600 = vmul.f32 %v599, -0.00019511016
        %v601 = vadd.f32 %v600, 0.008332121
        %v602 = vmul.f32 %v599, %v601
        %v603 = vadd.f32 %v602, -0.16666654
        %v604 = vmul.f32 %v599, %v603
        %v605 = vadd.f32 %v604, 1.0
        %v606 = vmul.f32 %v605, %v590
        %vm607 = vweird.f32 %v298
        %v608 = vadd.s32 %v591, 3
        %v609 = vand.u32 %v608, 3
        %vm610 = vcmp.lt.s32.totalorder %v609, 2
        %vm611 = vcmp.eq.s32.totalorder %v609, 0
        %v612 = vxor.u32 %v606, 2147483648
        %v613 = vsel %vm611, %v598, %v612
        %vm614 = vcmp.eq.s32.totalorder %v609, 2
        %v615 = vxor.u32 %v598, 2147483648
        %v616 = vsel %vm614, %v615, %v606
        %v617 = vsel %vm610, %v613, %v616
        %v618 = vsel %vm607, nan, %v617
        %v619 = vand.u32 2147483647, %v272
        %vm620 = vcmp.le.f32.partialorder %v619, 0.7853982
        %vm621 = vcmp.lt.s32.totalorder %v272, 0
        %v622 = vand.u32 %v272, 2139095040
        %v623 = vshrl.u32 %v622, 23
        %v624 = vsub.s32 %v623, 127
        %v625 = vand.u32 2147483647, %v272
        %v626 = vand.u32 %v625, 8388607
        %v627 = vor.u32 %v626, 8388608
        %v628 = vsub.s32 0, %v627
        %v629 = vadd.s32 %v624, 1
        %vm630 = vcmp.gt.s32.totalorder %v629, 0
        %v631 = vsel %vm630, %v629, 0
        %v632 = vshrl.u32 %v631, 5
        %v633 = vand.u32 %v631, 31
        %v634 = vsub.s32 32, %v633
        %v635 = vshrl.u32 683565275, %v634
        %v636 = vshll.u32 683565275, %v633
        %v637 = vshrl.u32 2475754826, %v634
        %v638 = vor.u32 %v636, %v637
        %v639 = vshll.u32 2475754826, %v633
        %v640 = vshrl.u32 2131351028, %v634
        %v641 = vor.u32 %v639, %v640
        %v642 = vshll.u32 2131351028, %v633
        %v643 = vshrl.u32 2102212464, %v634
        %v644 = vor.u32 %v642, %v643
        %v645 = vshll.u32 2102212464, %v633
        %v646 = vshrl.u32 920167782, %v634
        %v647 = vor.u32 %v645, %v646
        %v648 = vshll.u32 920167782, %v633
        %v649 = vshrl.u32 1326507024, %v634
        %v650 = vor.u32 %v648, %v649
        %vm651 = vcmp.lt.s32.totalorder %v632, 1
        %vm652 = vcmp.lt.s32.totalorder %v632, 2
        %vm653 = vcmp.lt.s32.totalorder %v632, 3
        %vm654 = vcmp.lt.s32.totalorder %v632, 4
        %v655 = vsel %vm651, %v635, %v638
        %v656 = vsel %vm654, %v644, 2102212464
        %v657 = vsel %vm653, %v641, %v656
        %v658 = vsel %vm652, %v655, %v657
        %v659 = vsel %vm651, %v638, %v641
        %v660 = vsel %vm654, %v647, 920167782
        %v661 = vsel %vm653, %v644, %v660
        %v662 = vsel %vm652, %v659, %v661
        %v663 = vsel %vm651, %v641, %v644
        %v664 = vsel %vm654, %v650, 1326507024
        %v665 = vsel %vm653, %v647, %v664
        %v666 = vsel %vm652, %v663, %v665
        %v667 = vshll.u32 %v627, 8
        %v668 = vand.u32 %v667, 65535
        %v669 = vshrl.u32 %v667, 16
        %v670 = vand.u32 %v666, 65535
        %v671 = vshrl.u32 %v666, 16
        %v672 = vmul.u32 %v668, %v670
        %v673 = vmul.u32 %v668, %v671
        %v674 = vmul.u32 %v669, %v670
        %v675 = vmul.u32 %v669, %v671
        %v676 = vshll.u32 %v673, 16
        %v677 = vshrl.u32 %v673, 16
        %v678 = vshll.u32 %v674, 16
        %v679 = vshrl.u32 %v674, 16
        %vm680 = vc.u32 %v672, %v676
        %v681 = vsel %vm680, 1, 0
        %v682 = vadd.s32 %v672, %v676
        %v683 = vadd.s32 %v675, %v681
        %vm684 = vc.u32 %v682, %v678
        %v685 = vsel %vm684, 1, 0
        %v686 = vadd.s32 %v682, %v678
        %v687 = vadd.s32 %v683, %v685
        %v688 = vadd.s32 %v687, %v677
        %v689 = vadd.s32 %v688, %v679
        %v690 = vand.u32 %v667, 65535
        %v691 = vshrl.u32 %v667, 16
        %v692 = vand.u32 %v662, 65535
        %v693 = vshrl.u32 %v662, 16
        %v694 = vmul.u32 %v690, %v692
        %v695 = vmul.u32 %v690, %v693
        %v696 = vmul.u32 %v691, %v692
        %v697 = vmul.u32 %v691, %v693
        %v698 = vshll.u32 %v695, 16
        %v699 = vshrl.u32 %v695, 16
        %v700 = vshll.u32 %v696, 16
        %v701 = vshrl.u32 %v696, 16
        %vm702 = vc.u32 %v694, %v698
        %v703 = vsel %vm702, 1, 0
        %v704 = vadd.s32 %v694, %v698
        %v705 = vadd.s32 %v697, %v703
        %vm706 = vc.u32 %v704, %v700
        %v707 = vsel %vm706, 1, 0
        %v708 = vadd.s32 %v704, %v700
        %v709 = vadd.s32 %v705, %v707
        %v710 = vadd.s32 %v709, %v699
        %v711 = vadd.s32 %v710, %v701
        %v712 = vmul.u32 %v667, %v658
        %v713 = vadd.s32 %v689, %v708
        %vm714 = vc.u32 %v689, %v708
        %v715 = vadd.s32 %v711, 1
        %v716 = vsel %vm714, %v715, %v711
        %v717 = vadd.s32 %v712, %v716
        %v718 = vadd.s32 %v717, 536870912
        %v719 = vshrl.u32 %v718, 30
        %v720 = vshll.u32 %v719, 30
        %v721 = vsub.s32 %v717, %v720
        %vm722 = vcmp.lt.s32.totalorder %v721, 0
        %v723 = vsub.s32 0, %v721
        %v724 = vsel %vm722, %v723, %v721
        %v725 = vclz %v724
        %v726 = vsub.s32 %v725, 2
        %vm727 = vcmp.gt.s32.totalorder 0, %v726
        %v728 = vsel %vm727, 0, %v726
        %v729 = vsub.s32 32, %v728
        %v730 = vshll.u32 %v721, %v728
        %v731 = vshrl.u32 %v713, %v729
        %v732 = vor.u32 %v730, %v731
        %v733 = vsub.s32 4294967266, %v728
        %v734 = vadd.s32 %v733, 127
        %v735 = vshll.u32 %v734, 23
        %v736 = vor.u32 4788187, %v735
        %v737 = vand.u32 2147483647, %v736
        %v739 = vcvt.s32.f32 %v732
        %v740 = vmul.f32 %v739, %v737
        %v741 = vxor.u32 %v740, 2147483648
        %v742 = vsel %vm621, %v741, %v740
        %v743 = vsub.s32 4, %v719
        %v744 = vsel %vm621, %v743, %v719
        %v745 = vsel %vm620, %v272, %v742
        %v746 = vsel %vm620, 0, %v744
        %v747 = vmul.f32 %v745, %v745
        %v748 = vmul.f32 %v747, -0.001358992
        %v749 = vadd.f32 %v748, 0.041655596
        %v750 = vmul.f32 %v747, %v749
        %v751 = vadd.f32 %v750, -0.4999988
        %v752 = vmul.f32 %v747, %v751
        %v753 = vadd.f32 1.0, %v752
        %v754 = vmul.f32 %v745, %v745
        %v755 = vmul.f32 %v754, -0.00019511016
        %v756 = vadd.f32 %v755, 0.008332121
        %v757 = vmul.f32 %v754, %v756
        %v758 = vadd.f32 %v757, -0.16666654
        %v759 = vmul.f32 %v754, %v758
        %v760 = vadd.f32 %v759, 1.0
        %v761 = vmul.f32 %v760, %v745
        %vm762 = vweird.f32 %v272
        %v763 = vadd.s32 %v746, 3
        %v764 = vand.u32 %v763, 3
        %vm765 = vcmp.lt.s32.totalorder %v764, 2
        %vm766 = vcmp.eq.s32.totalorder %v764, 0
        %v767 = vxor.u32 %v761, 2147483648
        %v768 = vsel %vm766, %v753, %v767
        %vm769 = vcmp.eq.s32.totalorder %v764, 2
        %v770 = vxor.u32 %v753, 2147483648
        %v771 = vsel %vm769, %v770, %v761
        %v772 = vsel %vm765, %v768, %v771
        %v773 = vsel %vm762, nan, %v772
        %v774 = vand.u32 2147483647, %v301
        %vm775 = vcmp.le.f32.partialorder %v774, 0.7853982
        %vm776 = vcmp.lt.s32.totalorder %v301, 0
        %v777 = vand.u32 %v301, 2139095040
        %v778 = vshrl.u32 %v777, 23
        %v779 = vsub.s32 %v778, 127
        %v780 = vand.u32 2147483647, %v301
        %v781 = vand.u32 %v780, 8388607
        %v782 = vor.u32 %v781, 8388608
        %v783 = vsub.s32 0, %v782
        %v784 = vadd.s32 %v779, 1
        %vm785 = vcmp.gt.s32.totalorder %v784, 0
        %v786 = vsel %vm785, %v784, 0
        %v787 = vshrl.u32 %v786, 5
        %v788 = vand.u32 %v786, 31
        %v789 = vsub.s32 32, %v788
        %v790 = vshrl.u32 683565275, %v789
        %v791 = vshll.u32 683565275, %v788
        %v792 = vshrl.u32 2475754826, %v789
        %v793 = vor.u32 %v791, %v792
        %v794 = vshll.u32 2475754826, %v788
        %v795 = vshrl.u32 2131351028, %v789
        %v796 = vor.u32 %v794, %v795
        %v797 = vshll.u32 2131351028, %v788
        %v798 = vshrl.u32 2102212464, %v789
        %v799 = vor.u32 %v797, %v798
        %v800 = vshll.u32 2102212464, %v788
        %v801 = vshrl.u32 920167782, %v789
        %v802 = vor.u32 %v800, %v801
        %v803 = vshll.u32 920167782, %v788
        %v804 = vshrl.u32 1326507024, %v789
        %v805 = vor.u32 %v803, %v804
        %vm806 = vcmp.lt.s32.totalorder %v787, 1
        %vm807 = vcmp.lt.s32.totalorder %v787, 2
        %vm808 = vcmp.lt.s32.totalorder %v787, 3
        %vm809 = vcmp.lt.s32.totalorder %v787, 4
        %v810 = vsel %vm806, %v790, %v793
        %v811 = vsel %vm809, %v799, 2102212464
        %v812 = vsel %vm808, %v796, %v811
        %v813 = vsel %vm807, %v810, %v812
        %v814 = vsel %vm806, %v793, %v796
        %v815 = vsel %vm809, %v802, 920167782
        %v816 = vsel %vm808, %v799, %v815
        %v817 = vsel %vm807, %v814, %v816
        %v818 = vsel %vm806, %v796, %v799
        %v819 = vsel %vm809, %v805, 1326507024
        %v820 = vsel %vm808, %v802, %v819
        %v821 = vsel %vm807, %v818, %v820
        %v822 = vshll.u32 %v782, 8
        %v823 = vand.u32 %v822, 65535
        %v824 = vshrl.u32 %v822, 16
        %v825 = vand.u32 %v821, 65535
        %v826 = vshrl.u32 %v821, 16
        %v827 = vmul.u32 %v823, %v825
        %v828 = vmul.u32 %v823, %v826
        %v829 = vmul.u32 %v824, %v825
        %v830 = vmul.u32 %v824, %v826
        %v831 = vshll.u32 %v828, 16
        %v832 = vshrl.u32 %v828, 16
        %v833 = vshll.u32 %v829, 16
        %v834 = vshrl.u32 %v829, 16
        %vm835 = vc.u32 %v827, %v831
        %v836 = vsel %vm835, 1, 0
        %v837 = vadd.s32 %v827, %v831
        %v838 = vadd.s32 %v830, %v836
        %vm839 = vc.u32 %v837, %v833
        %v840 = vsel %vm839, 1, 0
        %v841 = vadd.s32 %v837, %v833
        %v842 = vadd.s32 %v838, %v840
        %v843 = vadd.s32 %v842, %v832
        %v844 = vadd.s32 %v843, %v834
        %v845 = vand.u32 %v822, 65535
        %v846 = vshrl.u32 %v822, 16
        %v847 = vand.u32 %v817, 65535
        %v848 = vshrl.u32 %v817, 16
        %v849 = vmul.u32 %v845, %v847
        %v850 = vmul.u32 %v845, %v848
        %v851 = vmul.u32 %v846, %v847
        %v852 = vmul.u32 %v846, %v848
        %v853 = vshll.u32 %v850, 16
        %v854 = vshrl.u32 %v850, 16
        %v855 = vshll.u32 %v851, 16
        %v856 = vshrl.u32 %v851, 16
        %vm857 = vc.u32 %v849, %v853
        %v858 = vsel %vm857, 1, 0
        %v859 = vadd.s32 %v849, %v853
        %v860 = vadd.s32 %v852, %v858
        %vm861 = vc.u32 %v859, %v855
        %v862 = vsel %vm861, 1, 0
        %v863 = vadd.s32 %v859, %v855
        %v864 = vadd.s32 %v860, %v862
        %v865 = vadd.s32 %v864, %v854
        %v866 = vadd.s32 %v865, %v856
        %v867 = vmul.u32 %v822, %v813
        %v868 = vadd.s32 %v844, %v863
        %vm869 = vc.u32 %v844, %v863
        %v870 = vadd.s32 %v866, 1
        %v871 = vsel %vm869, %v870, %v866
        %v872 = vadd.s32 %v867, %v871
        %v873 = vadd.s32 %v872, 536870912
        %v874 = vshrl.u32 %v873, 30
        %v875 = vshll.u32 %v874, 30
        %v876 = vsub.s32 %v872, %v875
        %vm877 = vcmp.lt.s32.totalorder %v876, 0
        %v878 = vsub.s32 0, %v876
        %v879 = vsel %vm877, %v878, %v876
        %v880 = vclz %v879
        %v881 = vsub.s32 %v880, 2
        %vm882 = vcmp.gt.s32.totalorder 0, %v881
        %v883 = vsel %vm882, 0, %v881
        %v884 = vsub.s32 32, %v883
        %v885 = vshll.u32 %v876, %v883
        %v886 = vshrl.u32 %v868, %v884
        %v887 = vor.u32 %v885, %v886
        %v888 = vsub.s32 4294967266, %v883
        %v889 = vadd.s32 %v888, 127
        %v890 = vshll.u32 %v889, 23
        %v891 = vor.u32 4788187, %v890
        %v892 = vand.u32 2147483647, %v891
        %v894 = vcvt.s32.f32 %v887
        %v895 = vmul.f32 %v894, %v892
        %v896 = vxor.u32 %v895, 2147483648
        %v897 = vsel %vm776, %v896, %v895
        %v898 = vsub.s32 4, %v874
        %v899 = vsel %vm776, %v898, %v874
        %v900 = vsel %vm775, %v301, %v897
        %v901 = vsel %vm775, 0, %v899
        %v902 = vmul.f32 %v900, %v900
        %v903 = vmul.f32 %v902, -0.001358992
        %v904 = vadd.f32 %v903, 0.041655596
        %v905 = vmul.f32 %v902, %v904
        %v906 = vadd.f32 %v905, -0.4999988
        %v907 = vmul.f32 %v902, %v906
        %v908 = vadd.f32 1.0, %v907
        %v909 = vmul.f32 %v900, %v900
        %v910 = vmul.f32 %v909, -0.00019511016
        %v911 = vadd.f32 %v910, 0.008332121
        %v912 = vmul.f32 %v909, %v911
        %v913 = vadd.f32 %v912, -0.16666654
        %v914 = vmul.f32 %v909, %v913
        %v915 = vadd.f32 %v914, 1.0
        %v916 = vmul.f32 %v915, %v900
        %vm917 = vweird.f32 %v301
        %v918 = vadd.s32 %v901, 3
        %v919 = vand.u32 %v918, 3
        %vm920 = vcmp.lt.s32.totalorder %v919, 2
        %vm921 = vcmp.eq.s32.totalorder %v919, 0
        %v922 = vxor.u32 %v916, 2147483648
        %v923 = vsel %vm921, %v908, %v922
        %vm924 = vcmp.eq.s32.totalorder %v919, 2
        %v925 = vxor.u32 %v908, 2147483648
        %v926 = vsel %vm924, %v925, %v916
        %v927 = vsel %vm920, %v923, %v926
        %v928 = vsel %vm917, nan, %v927
        %v929 = vand.u32 2147483647, %v275
        %vm930 = vcmp.le.f32.partialorder %v929, 0.7853982
        %vm931 = vcmp.lt.s32.totalorder %v275, 0
        %v932 = vand.u32 %v275, 2139095040
        %v933 = vshrl.u32 %v932, 23
        %v934 = vsub.s32 %v933, 127
        %v935 = vand.u32 2147483647, %v275
        %v936 = vand.u32 %v935, 8388607
        %v937 = vor.u32 %v936, 8388608
        %v938 = vsub.s32 0, %v937
        %v939 = vadd.s32 %v934, 1
        %vm940 = vcmp.gt.s32.totalorder %v939, 0
        %v941 = vsel %vm940, %v939, 0
        %v942 = vshrl.u32 %v941, 5
        %v943 = vand.u32 %v941, 31
        %v944 = vsub.s32 32, %v943
        %v945 = vshrl.u32 683565275, %v944
        %v946 = vshll.u32 683565275, %v943
        %v947 = vshrl.u32 2475754826, %v944
        %v948 = vor.u32 %v946, %v947
        %v949 = vshll.u32 2475754826, %v943
        %v950 = vshrl.u32 2131351028, %v944
        %v951 = vor.u32 %v949, %v950
        %v952 = vshll.u32 2131351028, %v943
        %v953 = vshrl.u32 2102212464, %v944
        %v954 = vor.u32 %v952, %v953
        %v955 = vshll.u32 2102212464, %v943
        %v956 = vshrl.u32 920167782, %v944
        %v957 = vor.u32 %v955, %v956
        %v958 = vshll.u32 920167782, %v943
        %v959 = vshrl.u32 1326507024, %v944
        %v960 = vor.u32 %v958, %v959
        %vm961 = vcmp.lt.s32.totalorder %v942, 1
        %vm962 = vcmp.lt.s32.totalorder %v942, 2
        %vm963 = vcmp.lt.s32.totalorder %v942, 3
        %vm964 = vcmp.lt.s32.totalorder %v942, 4
        %v965 = vsel %vm961, %v945, %v948
        %v966 = vsel %vm964, %v954, 2102212464
        %v967 = vsel %vm963, %v951, %v966
        %v968 = vsel %vm962, %v965, %v967
        %v969 = vsel %vm961, %v948, %v951
        %v970 = vsel %vm964, %v957, 920167782
        %v971 = vsel %vm963, %v954, %v970
        %v972 = vsel %vm962, %v969, %v971
        %v973 = vsel %vm961, %v951, %v954
        %v974 = vsel %vm964, %v960, 1326507024
        %v975 = vsel %vm963, %v957, %v974
        %v976 = vsel %vm962, %v973, %v975
        %v977 = vshll.u32 %v937, 8
        %v978 = vand.u32 %v977, 65535
        %v979 = vshrl.u32 %v977, 16
        %v980 = vand.u32 %v976, 65535
        %v981 = vshrl.u32 %v976, 16
        %v982 = vmul.u32 %v978, %v980
        %v983 = vmul.u32 %v978, %v981
        %v984 = vmul.u32 %v979, %v980
        %v985 = vmul.u32 %v979, %v981
        %v986 = vshll.u32 %v983, 16
        %v987 = vshrl.u32 %v983, 16
        %v988 = vshll.u32 %v984, 16
        %v989 = vshrl.u32 %v984, 16
        %vm990 = vc.u32 %v982, %v986
        %v991 = vsel %vm990, 1, 0
        %v992 = vadd.s32 %v982, %v986
        %v993 = vadd.s32 %v985, %v991
        %vm994 = vc.u32 %v992, %v988
        %v995 = vsel %vm994, 1, 0
        %v996 = vadd.s32 %v992, %v988
        %v997 = vadd.s32 %v993, %v995
        %v998 = vadd.s32 %v997, %v987
        %v999 = vadd.s32 %v998, %v989
        %v1000 = vand.u32 %v977, 65535
        %v1001 = vshrl.u32 %v977, 16
        %v1002 = vand.u32 %v972, 65535
        %v1003 = vshrl.u32 %v972, 16
        %v1004 = vmul.u32 %v1000, %v1002
        %v1005 = vmul.u32 %v1000, %v1003
        %v1006 = vmul.u32 %v1001, %v1002
        %v1007 = vmul.u32 %v1001, %v1003
        %v1008 = vshll.u32 %v1005, 16
        %v1009 = vshrl.u32 %v1005, 16
        %v1010 = vshll.u32 %v1006, 16
        %v1011 = vshrl.u32 %v1006, 16
        %vm1012 = vc.u32 %v1004, %v1008
        %v1013 = vsel %vm1012, 1, 0
        %v1014 = vadd.s32 %v1004, %v1008
        %v1015 = vadd.s32 %v1007, %v1013
        %vm1016 = vc.u32 %v1014, %v1010
        %v1017 = vsel %vm1016, 1, 0
        %v1018 = vadd.s32 %v1014, %v1010
        %v1019 = vadd.s32 %v1015, %v1017
        %v1020 = vadd.s32 %v1019, %v1009
        %v1021 = vadd.s32 %v1020, %v1011
        %v1022 = vmul.u32 %v977, %v968
        %v1023 = vadd.s32 %v999, %v1018
        %vm1024 = vc.u32 %v999, %v1018
        %v1025 = vadd.s32 %v1021, 1
        %v1026 = vsel %vm1024, %v1025, %v1021
        %v1027 = vadd.s32 %v1022, %v1026
        %v1028 = vadd.s32 %v1027, 536870912
        %v1029 = vshrl.u32 %v1028, 30
        %v1030 = vshll.u32 %v1029, 30
        %v1031 = vsub.s32 %v1027, %v1030
        %vm1032 = vcmp.lt.s32.totalorder %v1031, 0
        %v1033 = vsub.s32 0, %v1031
        %v1034 = vsel %vm1032, %v1033, %v1031
        %v1035 = vclz %v1034
        %v1036 = vsub.s32 %v1035, 2
        %vm1037 = vcmp.gt.s32.totalorder 0, %v1036
        %v1038 = vsel %vm1037, 0, %v1036
        %v1039 = vsub.s32 32, %v1038
        %v1040 = vshll.u32 %v1031, %v1038
        %v1041 = vshrl.u32 %v1023, %v1039
        %v1042 = vor.u32 %v1040, %v1041
        %v1043 = vsub.s32 4294967266, %v1038
        %v1044 = vadd.s32 %v1043, 127
        %v1045 = vshll.u32 %v1044, 23
        %v1046 = vor.u32 4788187, %v1045
        %v1047 = vand.u32 2147483647, %v1046
        %v1049 = vcvt.s32.f32 %v1042
        %v1050 = vmul.f32 %v1049, %v1047
        %v1051 = vxor.u32 %v1050, 2147483648
        %v1052 = vsel %vm931, %v1051, %v1050
        %v1053 = vsub.s32 4, %v1029
        %v1054 = vsel %vm931, %v1053, %v1029
        %v1055 = vsel %vm930, %v275, %v1052
        %v1056 = vsel %vm930, 0, %v1054
        %v1057 = vmul.f32 %v1055, %v1055
        %v1058 = vmul.f32 %v1057, -0.001358992
        %v1059 = vadd.f32 %v1058, 0.041655596
        %v1060 = vmul.f32 %v1057, %v1059
        %v1061 = vadd.f32 %v1060, -0.4999988
        %v1062 = vmul.f32 %v1057, %v1061
        %v1063 = vadd.f32 1.0, %v1062
        %v1064 = vmul.f32 %v1055, %v1055
        %v1065 = vmul.f32 %v1064, -0.00019511016
        %v1066 = vadd.f32 %v1065, 0.008332121
        %v1067 = vmul.f32 %v1064, %v1066
        %v1068 = vadd.f32 %v1067, -0.16666654
        %v1069 = vmul.f32 %v1064, %v1068
        %v1070 = vadd.f32 %v1069, 1.0
        %v1071 = vmul.f32 %v1070, %v1055
        %vm1072 = vweird.f32 %v275
        %v1073 = vadd.s32 %v1056, 3
        %v1074 = vand.u32 %v1073, 3
        %vm1075 = vcmp.lt.s32.totalorder %v1074, 2
        %vm1076 = vcmp.eq.s32.totalorder %v1074, 0
        %v1077 = vxor.u32 %v1071, 2147483648
        %v1078 = vsel %vm1076, %v1063, %v1077
        %vm1079 = vcmp.eq.s32.totalorder %v1074, 2
        %v1080 = vxor.u32 %v1063, 2147483648
        %v1081 = vsel %vm1079, %v1080, %v1071
        %v1082 = vsel %vm1075, %v1078, %v1081
        %v1083 = vsel %vm1072, nan, %v1082
        %v1084 = vand.u32 2147483647, %v304
        %vm1085 = vcmp.le.f32.partialorder %v1084, 0.7853982
        %vm1086 = vcmp.lt.s32.totalorder %v304, 0
        %v1087 = vand.u32 %v304, 2139095040
        %v1088 = vshrl.u32 %v1087, 23
        %v1089 = vsub.s32 %v1088, 127
        %v1090 = vand.u32 2147483647, %v304
        %v1091 = vand.u32 %v1090, 8388607
        %v1092 = vor.u32 %v1091, 8388608
        %v1093 = vsub.s32 0, %v1092
        %v1094 = vadd.s32 %v1089, 1
        %vm1095 = vcmp.gt.s32.totalorder %v1094, 0
        %v1096 = vsel %vm1095, %v1094, 0
        %v1097 = vshrl.u32 %v1096, 5
        %v1098 = vand.u32 %v1096, 31
        %v1099 = vsub.s32 32, %v1098
        %v1100 = vshrl.u32 683565275, %v1099
        %v1101 = vshll.u32 683565275, %v1098
        %v1102 = vshrl.u32 2475754826, %v1099
        %v1103 = vor.u32 %v1101, %v1102
        %v1104 = vshll.u32 2475754826, %v1098
        %v1105 = vshrl.u32 2131351028, %v1099
        %v1106 = vor.u32 %v1104, %v1105
        %v1107 = vshll.u32 2131351028, %v1098
        %v1108 = vshrl.u32 2102212464, %v1099
        %v1109 = vor.u32 %v1107, %v1108
        %v1110 = vshll.u32 2102212464, %v1098
        %v1111 = vshrl.u32 920167782, %v1099
        %v1112 = vor.u32 %v1110, %v1111
        %v1113 = vshll.u32 920167782, %v1098
        %v1114 = vshrl.u32 1326507024, %v1099
        %v1115 = vor.u32 %v1113, %v1114
        %vm1116 = vcmp.lt.s32.totalorder %v1097, 1
        %vm1117 = vcmp.lt.s32.totalorder %v1097, 2
        %vm1118 = vcmp.lt.s32.totalorder %v1097, 3
        %vm1119 = vcmp.lt.s32.totalorder %v1097, 4
        %v1120 = vsel %vm1116, %v1100, %v1103
        %v1121 = vsel %vm1119, %v1109, 2102212464
        %v1122 = vsel %vm1118, %v1106, %v1121
        %v1123 = vsel %vm1117, %v1120, %v1122
        %v1124 = vsel %vm1116, %v1103, %v1106
        %v1125 = vsel %vm1119, %v1112, 920167782
        %v1126 = vsel %vm1118, %v1109, %v1125
        %v1127 = vsel %vm1117, %v1124, %v1126
        %v1128 = vsel %vm1116, %v1106, %v1109
        %v1129 = vsel %vm1119, %v1115, 1326507024
        %v1130 = vsel %vm1118, %v1112, %v1129
        %v1131 = vsel %vm1117, %v1128, %v1130
        %v1132 = vshll.u32 %v1092, 8
        %v1133 = vand.u32 %v1132, 65535
        %v1134 = vshrl.u32 %v1132, 16
        %v1135 = vand.u32 %v1131, 65535
        %v1136 = vshrl.u32 %v1131, 16
        %v1137 = vmul.u32 %v1133, %v1135
        %v1138 = vmul.u32 %v1133, %v1136
        %v1139 = vmul.u32 %v1134, %v1135
        %v1140 = vmul.u32 %v1134, %v1136
        %v1141 = vshll.u32 %v1138, 16
        %v1142 = vshrl.u32 %v1138, 16
        %v1143 = vshll.u32 %v1139, 16
        %v1144 = vshrl.u32 %v1139, 16
        %vm1145 = vc.u32 %v1137, %v1141
        %v1146 = vsel %vm1145, 1, 0
        %v1147 = vadd.s32 %v1137, %v1141
        %v1148 = vadd.s32 %v1140, %v1146
        %vm1149 = vc.u32 %v1147, %v1143
        %v1150 = vsel %vm1149, 1, 0
        %v1151 = vadd.s32 %v1147, %v1143
        %v1152 = vadd.s32 %v1148, %v1150
        %v1153 = vadd.s32 %v1152, %v1142
        %v1154 = vadd.s32 %v1153, %v1144
        %v1155 = vand.u32 %v1132, 65535
        %v1156 = vshrl.u32 %v1132, 16
        %v1157 = vand.u32 %v1127, 65535
        %v1158 = vshrl.u32 %v1127, 16
        %v1159 = vmul.u32 %v1155, %v1157
        %v1160 = vmul.u32 %v1155, %v1158
        %v1161 = vmul.u32 %v1156, %v1157
        %v1162 = vmul.u32 %v1156, %v1158
        %v1163 = vshll.u32 %v1160, 16
        %v1164 = vshrl.u32 %v1160, 16
        %v1165 = vshll.u32 %v1161, 16
        %v1166 = vshrl.u32 %v1161, 16
        %vm1167 = vc.u32 %v1159, %v1163
        %v1168 = vsel %vm1167, 1, 0
        %v1169 = vadd.s32 %v1159, %v1163
        %v1170 = vadd.s32 %v1162, %v1168
        %vm1171 = vc.u32 %v1169, %v1165
        %v1172 = vsel %vm1171, 1, 0
        %v1173 = vadd.s32 %v1169, %v1165
        %v1174 = vadd.s32 %v1170, %v1172
        %v1175 = vadd.s32 %v1174, %v1164
        %v1176 = vadd.s32 %v1175, %v1166
        %v1177 = vmul.u32 %v1132, %v1123
        %v1178 = vadd.s32 %v1154, %v1173
        %vm1179 = vc.u32 %v1154, %v1173
        %v1180 = vadd.s32 %v1176, 1
        %v1181 = vsel %vm1179, %v1180, %v1176
        %v1182 = vadd.s32 %v1177, %v1181
        %v1183 = vadd.s32 %v1182, 536870912
        %v1184 = vshrl.u32 %v1183, 30
        %v1185 = vshll.u32 %v1184, 30
        %v1186 = vsub.s32 %v1182, %v1185
        %vm1187 = vcmp.lt.s32.totalorder %v1186, 0
        %v1188 = vsub.s32 0, %v1186
        %v1189 = vsel %vm1187, %v1188, %v1186
        %v1190 = vclz %v1189
        %v1191 = vsub.s32 %v1190, 2
        %vm1192 = vcmp.gt.s32.totalorder 0, %v1191
        %v1193 = vsel %vm1192, 0, %v1191
        %v1194 = vsub.s32 32, %v1193
        %v1195 = vshll.u32 %v1186, %v1193
        %v1196 = vshrl.u32 %v1178, %v1194
        %v1197 = vor.u32 %v1195, %v1196
        %v1198 = vsub.s32 4294967266, %v1193
        %v1199 = vadd.s32 %v1198, 127
        %v1200 = vshll.u32 %v1199, 23
        %v1201 = vor.u32 4788187, %v1200
        %v1202 = vand.u32 2147483647, %v1201
        %v1204 = vcvt.s32.f32 %v1197
        %v1205 = vmul.f32 %v1204, %v1202
        %v1206 = vxor.u32 %v1205, 2147483648
        %v1207 = vsel %vm1086, %v1206, %v1205
        %v1208 = vsub.s32 4, %v1184
        %v1209 = vsel %vm1086, %v1208, %v1184
        %v1210 = vsel %vm1085, %v304, %v1207
        %v1211 = vsel %vm1085, 0, %v1209
        %v1212 = vmul.f32 %v1210, %v1210
        %v1213 = vmul.f32 %v1212, -0.001358992
        %v1214 = vadd.f32 %v1213, 0.041655596
        %v1215 = vmul.f32 %v1212, %v1214
        %v1216 = vadd.f32 %v1215, -0.4999988
        %v1217 = vmul.f32 %v1212, %v1216
        %v1218 = vadd.f32 1.0, %v1217
        %v1219 = vmul.f32 %v1210, %v1210
        %v1220 = vmul.f32 %v1219, -0.00019511016
        %v1221 = vadd.f32 %v1220, 0.008332121
        %v1222 = vmul.f32 %v1219, %v1221
        %v1223 = vadd.f32 %v1222, -0.16666654
        %v1224 = vmul.f32 %v1219, %v1223
        %v1225 = vadd.f32 %v1224, 1.0
        %v1226 = vmul.f32 %v1225, %v1210
        %vm1227 = vweird.f32 %v304
        %v1228 = vadd.s32 %v1211, 3
        %v1229 = vand.u32 %v1228, 3
        %vm1230 = vcmp.lt.s32.totalorder %v1229, 2
        %vm1231 = vcmp.eq.s32.totalorder %v1229, 0
        %v1232 = vxor.u32 %v1226, 2147483648
        %v1233 = vsel %vm1231, %v1218, %v1232
        %vm1234 = vcmp.eq.s32.totalorder %v1229, 2
        %v1235 = vxor.u32 %v1218, 2147483648
        %v1236 = vsel %vm1234, %v1235, %v1226
        %v1237 = vsel %vm1230, %v1233, %v1236
        %v1238 = vsel %vm1227, nan, %v1237
        %v1239 = vand.u32 2147483647, %v278
        %vm1240 = vcmp.le.f32.partialorder %v1239, 0.7853982
        %vm1241 = vcmp.lt.s32.totalorder %v278, 0
        %v1242 = vand.u32 %v278, 2139095040
        %v1243 = vshrl.u32 %v1242, 23
        %v1244 = vsub.s32 %v1243, 127
        %v1245 = vand.u32 2147483647, %v278
        %v1246 = vand.u32 %v1245, 8388607
        %v1247 = vor.u32 %v1246, 8388608
        %v1248 = vsub.s32 0, %v1247
        %v1249 = vadd.s32 %v1244, 1
        %vm1250 = vcmp.gt.s32.totalorder %v1249, 0
        %v1251 = vsel %vm1250, %v1249, 0
        %v1252 = vshrl.u32 %v1251, 5
        %v1253 = vand.u32 %v1251, 31
        %v1254 = vsub.s32 32, %v1253
        %v1255 = vshrl.u32 683565275, %v1254
        %v1256 = vshll.u32 683565275, %v1253
        %v1257 = vshrl.u32 2475754826, %v1254
        %v1258 = vor.u32 %v1256, %v1257
        %v1259 = vshll.u32 2475754826, %v1253
        %v1260 = vshrl.u32 2131351028, %v1254
        %v1261 = vor.u32 %v1259, %v1260
        %v1262 = vshll.u32 2131351028, %v1253
        %v1263 = vshrl.u32 2102212464, %v1254
        %v1264 = vor.u32 %v1262, %v1263
        %v1265 = vshll.u32 2102212464, %v1253
        %v1266 = vshrl.u32 920167782, %v1254
        %v1267 = vor.u32 %v1265, %v1266
        %v1268 = vshll.u32 920167782, %v1253
        %v1269 = vshrl.u32 1326507024, %v1254
        %v1270 = vor.u32 %v1268, %v1269
        %vm1271 = vcmp.lt.s32.totalorder %v1252, 1
        %vm1272 = vcmp.lt.s32.totalorder %v1252, 2
        %vm1273 = vcmp.lt.s32.totalorder %v1252, 3
        %vm1274 = vcmp.lt.s32.totalorder %v1252, 4
        %v1275 = vsel %vm1271, %v1255, %v1258
        %v1276 = vsel %vm1274, %v1264, 2102212464
        %v1277 = vsel %vm1273, %v1261, %v1276
        %v1278 = vsel %vm1272, %v1275, %v1277
        %v1279 = vsel %vm1271, %v1258, %v1261
        %v1280 = vsel %vm1274, %v1267, 920167782
        %v1281 = vsel %vm1273, %v1264, %v1280
        %v1282 = vsel %vm1272, %v1279, %v1281
        %v1283 = vsel %vm1271, %v1261, %v1264
        %v1284 = vsel %vm1274, %v1270, 1326507024
        %v1285 = vsel %vm1273, %v1267, %v1284
        %v1286 = vsel %vm1272, %v1283, %v1285
        %v1287 = vshll.u32 %v1247, 8
        %v1288 = vand.u32 %v1287, 65535
        %v1289 = vshrl.u32 %v1287, 16
        %v1290 = vand.u32 %v1286, 65535
        %v1291 = vshrl.u32 %v1286, 16
        %v1292 = vmul.u32 %v1288, %v1290
        %v1293 = vmul.u32 %v1288, %v1291
        %v1294 = vmul.u32 %v1289, %v1290
        %v1295 = vmul.u32 %v1289, %v1291
        %v1296 = vshll.u32 %v1293, 16
        %v1297 = vshrl.u32 %v1293, 16
        %v1298 = vshll.u32 %v1294, 16
        %v1299 = vshrl.u32 %v1294, 16
        %vm1300 = vc.u32 %v1292, %v1296
        %v1301 = vsel %vm1300, 1, 0
        %v1302 = vadd.s32 %v1292, %v1296
        %v1303 = vadd.s32 %v1295, %v1301
        %vm1304 = vc.u32 %v1302, %v1298
        %v1305 = vsel %vm1304, 1, 0
        %v1306 = vadd.s32 %v1302, %v1298
        %v1307 = vadd.s32 %v1303, %v1305
        %v1308 = vadd.s32 %v1307, %v1297
        %v1309 = vadd.s32 %v1308, %v1299
        %v1310 = vand.u32 %v1287, 65535
        %v1311 = vshrl.u32 %v1287, 16
        %v1312 = vand.u32 %v1282, 65535
        %v1313 = vshrl.u32 %v1282, 16
        %v1314 = vmul.u32 %v1310, %v1312
        %v1315 = vmul.u32 %v1310, %v1313
        %v1316 = vmul.u32 %v1311, %v1312
        %v1317 = vmul.u32 %v1311, %v1313
        %v1318 = vshll.u32 %v1315, 16
        %v1319 = vshrl.u32 %v1315, 16
        %v1320 = vshll.u32 %v1316, 16
        %v1321 = vshrl.u32 %v1316, 16
        %vm1322 = vc.u32 %v1314, %v1318
        %v1323 = vsel %vm1322, 1, 0
        %v1324 = vadd.s32 %v1314, %v1318
        %v1325 = vadd.s32 %v1317, %v1323
        %vm1326 = vc.u32 %v1324, %v1320
        %v1327 = vsel %vm1326, 1, 0
        %v1328 = vadd.s32 %v1324, %v1320
        %v1329 = vadd.s32 %v1325, %v1327
        %v1330 = vadd.s32 %v1329, %v1319
        %v1331 = vadd.s32 %v1330, %v1321
        %v1332 = vmul.u32 %v1287, %v1278
        %v1333 = vadd.s32 %v1309, %v1328
        %vm1334 = vc.u32 %v1309, %v1328
        %v1335 = vadd.s32 %v1331, 1
        %v1336 = vsel %vm1334, %v1335, %v1331
        %v1337 = vadd.s32 %v1332, %v1336
        %v1338 = vadd.s32 %v1337, 536870912
        %v1339 = vshrl.u32 %v1338, 30
        %v1340 = vshll.u32 %v1339, 30
        %v1341 = vsub.s32 %v1337, %v1340
        %vm1342 = vcmp.lt.s32.totalorder %v1341, 0
        %v1343 = vsub.s32 0, %v1341
        %v1344 = vsel %vm1342, %v1343, %v1341
        %v1345 = vclz %v1344
        %v1346 = vsub.s32 %v1345, 2
        %vm1347 = vcmp.gt.s32.totalorder 0, %v1346
        %v1348 = vsel %vm1347, 0, %v1346
        %v1349 = vsub.s32 32, %v1348
        %v1350 = vshll.u32 %v1341, %v1348
        %v1351 = vshrl.u32 %v1333, %v1349
        %v1352 = vor.u32 %v1350, %v1351
        %v1353 = vsub.s32 4294967266, %v1348
        %v1354 = vadd.s32 %v1353, 127
        %v1355 = vshll.u32 %v1354, 23
        %v1356 = vor.u32 4788187, %v1355
        %v1357 = vand.u32 2147483647, %v1356
        %v1359 = vcvt.s32.f32 %v1352
        %v1360 = vmul.f32 %v1359, %v1357
        %v1361 = vxor.u32 %v1360, 2147483648
        %v1362 = vsel %vm1241, %v1361, %v1360
        %v1363 = vsub.s32 4, %v1339
        %v1364 = vsel %vm1241, %v1363, %v1339
        %v1365 = vsel %vm1240, %v278, %v1362
        %v1366 = vsel %vm1240, 0, %v1364
        %v1367 = vmul.f32 %v1365, %v1365
        %v1368 = vmul.f32 %v1367, -0.001358992
        %v1369 = vadd.f32 %v1368, 0.041655596
        %v1370 = vmul.f32 %v1367, %v1369
        %v1371 = vadd.f32 %v1370, -0.4999988
        %v1372 = vmul.f32 %v1367, %v1371
        %v1373 = vadd.f32 1.0, %v1372
        %v1374 = vmul.f32 %v1365, %v1365
        %v1375 = vmul.f32 %v1374, -0.00019511016
        %v1376 = vadd.f32 %v1375, 0.008332121
        %v1377 = vmul.f32 %v1374, %v1376
        %v1378 = vadd.f32 %v1377, -0.16666654
        %v1379 = vmul.f32 %v1374, %v1378
        %v1380 = vadd.f32 %v1379, 1.0
        %v1381 = vmul.f32 %v1380, %v1365
        %vm1382 = vweird.f32 %v278
        %v1383 = vadd.s32 %v1366, 3
        %v1384 = vand.u32 %v1383, 3
        %vm1385 = vcmp.lt.s32.totalorder %v1384, 2
        %vm1386 = vcmp.eq.s32.totalorder %v1384, 0
        %v1387 = vxor.u32 %v1381, 2147483648
        %v1388 = vsel %vm1386, %v1373, %v1387
        %vm1389 = vcmp.eq.s32.totalorder %v1384, 2
        %v1390 = vxor.u32 %v1373, 2147483648
        %v1391 = vsel %vm1389, %v1390, %v1381
        %v1392 = vsel %vm1385, %v1388, %v1391
        %v1393 = vsel %vm1382, nan, %v1392
        %v1394 = vand.u32 2147483647, %v307
        %vm1395 = vcmp.le.f32.partialorder %v1394, 0.7853982
        %vm1396 = vcmp.lt.s32.totalorder %v307, 0
        %v1397 = vand.u32 %v307, 2139095040
        %v1398 = vshrl.u32 %v1397, 23
        %v1399 = vsub.s32 %v1398, 127
        %v1400 = vand.u32 2147483647, %v307
        %v1401 = vand.u32 %v1400, 8388607
        %v1402 = vor.u32 %v1401, 8388608
        %v1403 = vsub.s32 0, %v1402
        %v1404 = vadd.s32 %v1399, 1
        %vm1405 = vcmp.gt.s32.totalorder %v1404, 0
        %v1406 = vsel %vm1405, %v1404, 0
        %v1407 = vshrl.u32 %v1406, 5
        %v1408 = vand.u32 %v1406, 31
        %v1409 = vsub.s32 32, %v1408
        %v1410 = vshrl.u32 683565275, %v1409
        %v1411 = vshll.u32 683565275, %v1408
        %v1412 = vshrl.u32 2475754826, %v1409
        %v1413 = vor.u32 %v1411, %v1412
        %v1414 = vshll.u32 2475754826, %v1408
        %v1415 = vshrl.u32 2131351028, %v1409
        %v1416 = vor.u32 %v1414, %v1415
        %v1417 = vshll.u32 2131351028, %v1408
        %v1418 = vshrl.u32 2102212464, %v1409
        %v1419 = vor.u32 %v1417, %v1418
        %v1420 = vshll.u32 2102212464, %v1408
        %v1421 = vshrl.u32 920167782, %v1409
        %v1422 = vor.u32 %v1420, %v1421
        %v1423 = vshll.u32 920167782, %v1408
        %v1424 = vshrl.u32 1326507024, %v1409
        %v1425 = vor.u32 %v1423, %v1424
        %vm1426 = vcmp.lt.s32.totalorder %v1407, 1
        %vm1427 = vcmp.lt.s32.totalorder %v1407, 2
        %vm1428 = vcmp.lt.s32.totalorder %v1407, 3
        %vm1429 = vcmp.lt.s32.totalorder %v1407, 4
        %v1430 = vsel %vm1426, %v1410, %v1413
        %v1431 = vsel %vm1429, %v1419, 2102212464
        %v1432 = vsel %vm1428, %v1416, %v1431
        %v1433 = vsel %vm1427, %v1430, %v1432
        %v1434 = vsel %vm1426, %v1413, %v1416
        %v1435 = vsel %vm1429, %v1422, 920167782
        %v1436 = vsel %vm1428, %v1419, %v1435
        %v1437 = vsel %vm1427, %v1434, %v1436
        %v1438 = vsel %vm1426, %v1416, %v1419
        %v1439 = vsel %vm1429, %v1425, 1326507024
        %v1440 = vsel %vm1428, %v1422, %v1439
        %v1441 = vsel %vm1427, %v1438, %v1440
        %v1442 = vshll.u32 %v1402, 8
        %v1443 = vand.u32 %v1442, 65535
        %v1444 = vshrl.u32 %v1442, 16
        %v1445 = vand.u32 %v1441, 65535
        %v1446 = vshrl.u32 %v1441, 16
        %v1447 = vmul.u32 %v1443, %v1445
        %v1448 = vmul.u32 %v1443, %v1446
        %v1449 = vmul.u32 %v1444, %v1445
        %v1450 = vmul.u32 %v1444, %v1446
        %v1451 = vshll.u32 %v1448, 16
        %v1452 = vshrl.u32 %v1448, 16
        %v1453 = vshll.u32 %v1449, 16
        %v1454 = vshrl.u32 %v1449, 16
        %vm1455 = vc.u32 %v1447, %v1451
        %v1456 = vsel %vm1455, 1, 0
        %v1457 = vadd.s32 %v1447, %v1451
        %v1458 = vadd.s32 %v1450, %v1456
        %vm1459 = vc.u32 %v1457, %v1453
        %v1460 = vsel %vm1459, 1, 0
        %v1461 = vadd.s32 %v1457, %v1453
        %v1462 = vadd.s32 %v1458, %v1460
        %v1463 = vadd.s32 %v1462, %v1452
        %v1464 = vadd.s32 %v1463, %v1454
        %v1465 = vand.u32 %v1442, 65535
        %v1466 = vshrl.u32 %v1442, 16
        %v1467 = vand.u32 %v1437, 65535
        %v1468 = vshrl.u32 %v1437, 16
        %v1469 = vmul.u32 %v1465, %v1467
        %v1470 = vmul.u32 %v1465, %v1468
        %v1471 = vmul.u32 %v1466, %v1467
        %v1472 = vmul.u32 %v1466, %v1468
        %v1473 = vshll.u32 %v1470, 16
        %v1474 = vshrl.u32 %v1470, 16
        %v1475 = vshll.u32 %v1471, 16
        %v1476 = vshrl.u32 %v1471, 16
        %vm1477 = vc.u32 %v1469, %v1473
        %v1478 = vsel %vm1477, 1, 0
        %v1479 = vadd.s32 %v1469, %v1473
        %v1480 = vadd.s32 %v1472, %v1478
        %vm1481 = vc.u32 %v1479, %v1475
        %v1482 = vsel %vm1481, 1, 0
        %v1483 = vadd.s32 %v1479, %v1475
        %v1484 = vadd.s32 %v1480, %v1482
        %v1485 = vadd.s32 %v1484, %v1474
        %v1486 = vadd.s32 %v1485, %v1476
        %v1487 = vmul.u32 %v1442, %v1433
        %v1488 = vadd.s32 %v1464, %v1483
        %vm1489 = vc.u32 %v1464, %v1483
        %v1490 = vadd.s32 %v1486, 1
        %v1491 = vsel %vm1489, %v1490, %v1486
        %v1492 = vadd.s32 %v1487, %v1491
        %v1493 = vadd.s32 %v1492, 536870912
        %v1494 = vshrl.u32 %v1493, 30
        %v1495 = vshll.u32 %v1494, 30
        %v1496 = vsub.s32 %v1492, %v1495
        %vm1497 = vcmp.lt.s32.totalorder %v1496, 0
        %v1498 = vsub.s32 0, %v1496
        %v1499 = vsel %vm1497, %v1498, %v1496
        %v1500 = vclz %v1499
        %v1501 = vsub.s32 %v1500, 2
        %vm1502 = vcmp.gt.s32.totalorder 0, %v1501
        %v1503 = vsel %vm1502, 0, %v1501
        %v1504 = vsub.s32 32, %v1503
        %v1505 = vshll.u32 %v1496, %v1503
        %v1506 = vshrl.u32 %v1488, %v1504
        %v1507 = vor.u32 %v1505, %v1506
        %v1508 = vsub.s32 4294967266, %v1503
        %v1509 = vadd.s32 %v1508, 127
        %v1510 = vshll.u32 %v1509, 23
        %v1511 = vor.u32 4788187, %v1510
        %v1512 = vand.u32 2147483647, %v1511
        %v1514 = vcvt.s32.f32 %v1507
        %v1515 = vmul.f32 %v1514, %v1512
        %v1516 = vxor.u32 %v1515, 2147483648
        %v1517 = vsel %vm1396, %v1516, %v1515
        %v1518 = vsub.s32 4, %v1494
        %v1519 = vsel %vm1396, %v1518, %v1494
        %v1520 = vsel %vm1395, %v307, %v1517
        %v1521 = vsel %vm1395, 0, %v1519
        %v1522 = vmul.f32 %v1520, %v1520
        %v1523 = vmul.f32 %v1522, -0.001358992
        %v1524 = vadd.f32 %v1523, 0.041655596
        %v1525 = vmul.f32 %v1522, %v1524
        %v1526 = vadd.f32 %v1525, -0.4999988
        %v1527 = vmul.f32 %v1522, %v1526
        %v1528 = vadd.f32 1.0, %v1527
        %v1529 = vmul.f32 %v1520, %v1520
        %v1530 = vmul.f32 %v1529, -0.00019511016
        %v1531 = vadd.f32 %v1530, 0.008332121
        %v1532 = vmul.f32 %v1529, %v1531
        %v1533 = vadd.f32 %v1532, -0.16666654
        %v1534 = vmul.f32 %v1529, %v1533
        %v1535 = vadd.f32 %v1534, 1.0
        %v1536 = vmul.f32 %v1535, %v1520
        %vm1537 = vweird.f32 %v307
        %v1538 = vadd.s32 %v1521, 3
        %v1539 = vand.u32 %v1538, 3
        %vm1540 = vcmp.lt.s32.totalorder %v1539, 2
        %vm1541 = vcmp.eq.s32.totalorder %v1539, 0
        %v1542 = vxor.u32 %v1536, 2147483648
        %v1543 = vsel %vm1541, %v1528, %v1542
        %vm1544 = vcmp.eq.s32.totalorder %v1539, 2
        %v1545 = vxor.u32 %v1528, 2147483648
        %v1546 = vsel %vm1544, %v1545, %v1536
        %v1547 = vsel %vm1540, %v1543, %v1546
        %v1548 = vsel %vm1537, nan, %v1547
        %1549 = vst [vmem:[%s188] sm:$0xff] %v463
        %1550 = vst [vmem:[%s188 + $0x8] sm:$0xff] %v618
        %1551 = vst [vmem:[%s188 + $0x10] sm:$0xff] %v773
        %1552 = vst [vmem:[%s188 + $0x18] sm:$0xff] %v928
        %1553 = vst [vmem:[%s188 + $0x20] sm:$0xff] %v1083
        %1554 = vst [vmem:[%s188 + $0x28] sm:$0xff] %v1238
        %1555 = vst [vmem:[%s188 + $0x30] sm:$0xff] %v1393
        %1556 = vst [vmem:[%s188 + $0x38] sm:$0xff] %v1548
        %s1557 = sand.u32 %s109, 1
        %s1558 = scalar_lea.sflag [#allocation3], %s1557
        %s1559 = sand.u32 %s109, 1
        %s1560 = smul.addr %s1559, 64
        %s1561 = scalar_lea.vmem [#allocation2], %s1560
        // Predicated region
        $region33: #{tpu_custom_call.1} parent=31 // pred_check
          %p1562 = pneg %p119
        $region34: #{tpu_custom_call.1} parent=31 // pred_check_branch
          %1564 = sbr.rel (%p1562) target = $region36
        $region35: #{tpu_custom_call.1} parent=31 // pred_region
          %s1565 = smul.u32 2, %s22
          %1567 = vsyncadd %s1558, 0
          %s1568 = smul.addr %s21, 8
          %s1569 = sadd.s32 %s1565, %s1568
          %s1570 = smul.addr %s1569, 8
          %s1571 = scalar_lea.hbm %s3, %s1570
          %s1572 = sshll.u32 %s1561, 4
          %s1573 = int_to_ptr.vmem [resolvable:$true] %s1572
          %s1574 = sshll.u32 %s1571, 4
          %s1575 = int_to_ptr.hbm [resolvable:$true] %s1574
          %1580 = dma.vmem_to_hbm [thread:$0]  %s1573, 1024, %s1575, %s1558, 256, 256, 16
        $region36: #{tpu_custom_call.1} parent=31 // pred_fallthru
          _
      $region32: #{tpu_custom_call.1} parent=5 // pred_fallthru
        _
      %p1581 = scmp.le.s32.totalorder 2, %s12
      // Predicated region
      $region37: #{tpu_custom_call.1} parent=5 // pred_check
        %p1582 = pneg %p1581
      $region38: #{tpu_custom_call.1} parent=5 // pred_check_branch
        %1584 = sbr.rel (%p1582) target = $region40
      $region39: #{tpu_custom_call.1} parent=5 // pred_region
        %s1585 = ssub.s32 %s12, 2
        // Predicated region
        $region41: #{tpu_custom_call.1} parent=39 // pred_check
          %p1586 = pneg %p125
        $region42: #{tpu_custom_call.1} parent=39 // pred_check_branch
          %1588 = sbr.rel (%p1586) target = $region44
        $region43: #{tpu_custom_call.1} parent=39 // pred_region
          %s1589 = sand.u32 %s110, 1
          %s1590 = scalar_lea.sflag [#allocation3], %s1589
          %s1591 = sand.u32 %s110, 1
          %s1592 = smul.addr %s1591, 64
          %s1593 = scalar_lea.vmem [#allocation2], %s1592
          %1595 = dma.done %s1590, 1024
        $region44: #{tpu_custom_call.1} parent=39 // pred_fallthru
          _
      $region40: #{tpu_custom_call.1} parent=5 // pred_fallthru
        _
    $region6: #{tpu_custom_call.1} parent=1 // loop_footer
      %s16 = sadd.s32 1, %s12
    $region7: #{tpu_custom_call.1} parent=1 // loop_footer_branch
      %11 = sbr.rel target = $region3
    $region8: #{tpu_custom_call.1} parent=1 // loop_exit
      _
    %1596 = vsyncpa [#allocation3], 1
    %s1597 = scalar_lea.sflag [#allocation3], 1
    %1598 = vsyncpa %s1597, 1

</llo_original>
